<compile_context>
chip_gen: v6e
topology: v6e:2x2x1
jax: 0.10.0
libtpu: 0.0.40
codegen_flags: <defaults>
</compile_context>

<pallas_src>
import math
import functools

import jax
import jax.numpy as jnp
from jax import lax
from jax.experimental import pallas as pl
from jax.experimental.pallas import tpu as pltpu


def _aligner_kernel(x_ref, w_ref, a_ref, b_ref, bias_ref, o_ref, acc_ref):
    # K-reduction axis is grid axis 2 ("arbitrary"); accumulate in f32 scratch.
    @pl.when(pl.program_id(2) == 0)
    def _init():
        acc_ref[...] = jnp.zeros_like(acc_ref)

    # Contract last dim of both operands (K-vs-K / R-vs-R): feeds the MXU
    # directly with no explicit transpose / relayout of the weight tiles.
    dn = (((1,), (1,)), ((), ()))

    x = x_ref[...]                                       # [tm, tk] bf16
    # Main path: x · W^T
    main = lax.dot_general(x, w_ref[...], dn,
                           preferred_element_type=jnp.float32)   # [tm, tn] f32
    # Low-rank residual path: (x · B^T) · A^T  — never materializes W + A@B.
    t = lax.dot_general(x, b_ref[...], dn,
                        preferred_element_type=jnp.float32)       # [tm, R] f32
    low = lax.dot_general(t.astype(x.dtype), a_ref[...], dn,
                          preferred_element_type=jnp.float32)     # [tm, tn] f32

    acc_ref[...] += main + low

    @pl.when(pl.program_id(2) == pl.num_programs(2) - 1)
    def _finalize():
        o_ref[...] = (acc_ref[...] + bias_ref[...]).astype(o_ref.dtype)


def _round_up(v, m):
    return (v + m - 1) // m * m


@functools.partial(jax.jit, static_argnames=("tm", "tn", "tk"))
def residual_aligner_forward(x, weight, A, B, bias, *, tm=256, tn=256, tk=512):
    """y = F.linear(x, weight + A @ B, bias), via a Pallas TPU kernel.

    x:      [..., in_features]
    weight: [out_features, in_features]
    A:      [out_features, rank]
    B:      [rank, in_features]
    bias:   [out_features]

    Note: on v5e, tn=128 (MXU-native width, single vst slot) with a taller tm
    is preferred; defaults here target v6e/v7x.
    """
    *lead, K = x.shape
    N, K_w = weight.shape
    assert K == K_w
    R = A.shape[1]
    out_dtype = x.dtype

    M = 1
    for d in lead:
        M *= d
    x2 = x.reshape(M, K)

    # Effective tile sizes, clamped to the (aligned) problem size.
    tm_e = min(tm, _round_up(M, 8))       # sublane-aligned rows
    tn_e = min(tn, _round_up(N, 128))     # lane-dense output tiles
    tk_e = min(tk, _round_up(K, 128))     # lane-dense contraction tiles

    Mp = _round_up(M, tm_e)
    Np = _round_up(N, tn_e)
    Kp = _round_up(K, tk_e)

    # Zero padding: padded K contributes 0 to the contraction; padded M/N
    # rows/cols are sliced off below. MXU operands in bf16, f32 accumulate.
    x_p = jnp.pad(x2, ((0, Mp - M), (0, Kp - K))).astype(jnp.bfloat16)
    w_p = jnp.pad(weight, ((0, Np - N), (0, Kp - K))).astype(jnp.bfloat16)
    a_p = jnp.pad(A, ((0, Np - N), (0, 0))).astype(jnp.bfloat16)
    b_p = jnp.pad(B, ((0, 0), (0, Kp - K))).astype(jnp.bfloat16)
    bias_p = jnp.pad(bias, (0, Np - N)).reshape(1, Np).astype(jnp.float32)

    grid = (Mp // tm_e, Np // tn_e, Kp // tk_e)

    out = pl.pallas_call(
        _aligner_kernel,
        out_shape=jax.ShapeDtypeStruct((Mp, Np), out_dtype),
        grid_spec=pltpu.PrefetchScalarGridSpec(
            num_scalar_prefetch=0,
            grid=grid,
            in_specs=[
                pl.BlockSpec((tm_e, tk_e), lambda i, j, k: (i, k)),  # x tile
                pl.BlockSpec((tn_e, tk_e), lambda i, j, k: (j, k)),  # W tile
                pl.BlockSpec((tn_e, R), lambda i, j, k: (j, 0)),     # A tile
                pl.BlockSpec((R, tk_e), lambda i, j, k: (0, k)),     # B tile
                pl.BlockSpec((1, tn_e), lambda i, j, k: (0, j)),     # bias row
            ],
            out_specs=pl.BlockSpec((tm_e, tn_e), lambda i, j, k: (i, j)),
            scratch_shapes=[pltpu.VMEM((tm_e, tn_e), jnp.float32)],
        ),
        compiler_params=pltpu.CompilerParams(
            dimension_semantics=("parallel", "parallel", "arbitrary"),
            vmem_limit_bytes=48 * 1024 * 1024,
        ),
    )(x_p, w_p, a_p, b_p, bias_p)

    return out[:M, :N].reshape(*lead, N)


if __name__ == "__main__":
    # Small shapes: batch=2, seq=8, in_features=32, out_features=64, rank=4
    batch, seq, in_f, out_f, rank = 2, 8, 32, 64, 4

    key = jax.random.PRNGKey(0)
    kx, kw, ka, kb, kbias = jax.random.split(key, 5)

    x = jax.random.normal(kx, (batch, seq, in_f), dtype=jnp.float32)
    weight = jax.random.normal(kw, (out_f, in_f), dtype=jnp.float32) * 0.1

    # A: kaiming_uniform_(a=sqrt(5)) on (out_f, rank) -> U(-1/sqrt(rank), 1/sqrt(rank))
    bound_a = 1.0 / math.sqrt(rank)
    A = jax.random.uniform(
        ka, (out_f, rank), minval=-bound_a, maxval=bound_a, dtype=jnp.float32
    )
    # NOTE: the PyTorch module initializes B to zeros (so A@B == 0 at init);
    # we use a small deterministic nonzero B here so the residual path is exercised.
    B = jax.random.uniform(
        kb, (rank, in_f), minval=-0.1, maxval=0.1, dtype=jnp.float32
    )
    bias = jax.random.normal(kbias, (out_f,), dtype=jnp.float32) * 0.1

    y = residual_aligner_forward(x, weight, A, B, bias)
    y = jax.block_until_ready(y)

    # Pure-JAX f32 reference: F.linear(x, weight + A@B, bias).
    # Tolerance reflects bf16 MXU operands (f32 accumulation) in the kernel.
    w_eff = weight + A @ B
    y_ref = jnp.einsum("bsk,nk->bsn", x, w_eff) + bias

    assert y.shape == (batch, seq, out_f)
    assert jnp.allclose(y, y_ref, atol=5e-2, rtol=5e-2), (
        float(jnp.max(jnp.abs(y - y_ref)))
    )
    print("KERNEL_OK")
</pallas_src>

<mosaic_0001>
module attributes {stable_mosaic.version = 11 : i64} {
  func.func @_aligner_kernel(%arg0: i32, %arg1: i32, %arg2: i32, %arg3: memref<16x128xbf16, #tpu.memory_space<vmem>>, %arg4: memref<128x128xbf16, #tpu.memory_space<vmem>>, %arg5: memref<128x4xbf16, #tpu.memory_space<vmem>>, %arg6: memref<4x128xbf16, #tpu.memory_space<vmem>>, %arg7: memref<1x128xf32, #tpu.memory_space<vmem>>, %arg8: memref<16x128xf32, #tpu.memory_space<vmem>>, %arg9: memref<16x128xf32, #tpu.memory_space<vmem>>) attributes {dimension_semantics = [#tpu.dimension_semantics<parallel>, #tpu.dimension_semantics<parallel>, #tpu.dimension_semantics<arbitrary>], iteration_bounds = array<i64: 1, 1, 1>, scalar_prefetch = 0 : i64, scratch_operands = 1 : i64, tpu.core_type = #tpu.core_type<tc>, window_params = [{transform_indices = @transform_0, window_bounds = array<i64: 16, 128>}, {transform_indices = @transform_1, window_bounds = array<i64: 128, 128>}, {transform_indices = @transform_2, window_bounds = array<i64: 128, 4>}, {transform_indices = @transform_3, window_bounds = array<i64: 4, 128>}, {transform_indices = @transform_4, window_bounds = array<i64: 1, 128>}, {transform_indices = @transform_5, window_bounds = array<i64: 16, 128>}]} {
    %c0_i32 = arith.constant 0 : i32
    %0 = arith.cmpi eq, %arg2, %c0_i32 : i32
    %1 = arith.extui %0 : i1 to i32
    %c0_i32_0 = arith.constant 0 : i32
    %2 = arith.cmpi ne, %1, %c0_i32_0 : i32
    scf.if %2 {
      %cst_16 = arith.constant 0.000000e+00 : f32
      %18 = vector.broadcast %cst_16 : f32 to vector<16x128xf32>
      %c0_17 = arith.constant 0 : index
      %c0_18 = arith.constant 0 : index
      %19 = vector.load %arg9[%c0_17, %c0_18] : memref<16x128xf32, #tpu.memory_space<vmem>>, vector<16x128xf32>
      tpu.vector_store %arg9[%c0_17, %c0_18], %18 {strides = array<i32>} : memref<16x128xf32, #tpu.memory_space<vmem>>, vector<16x128xf32>,
    } else {
    }
    %c0 = arith.constant 0 : index
    %c0_1 = arith.constant 0 : index
    %3 = vector.load %arg3[%c0, %c0_1] : memref<16x128xbf16, #tpu.memory_space<vmem>>, vector<16x128xbf16>
    %c0_2 = arith.constant 0 : index
    %c0_3 = arith.constant 0 : index
    %4 = vector.load %arg4[%c0_2, %c0_3] : memref<128x128xbf16, #tpu.memory_space<vmem>>, vector<128x128xbf16>
    %cst = arith.constant dense<0.000000e+00> : vector<16x128xf32>
    %5 = tpu.matmul %3, %4, %cst {dimension_numbers = #tpu.dot_dimension_numbers<[1], [1], [0], [0], [0, 0, 1, 0], [], []>} : vector<16x128xbf16>, vector<128x128xbf16>, vector<16x128xf32> -> vector<16x128xf32>
    %c0_4 = arith.constant 0 : index
    %c0_5 = arith.constant 0 : index
    %6 = vector.load %arg6[%c0_4, %c0_5] : memref<4x128xbf16, #tpu.memory_space<vmem>>, vector<4x128xbf16>
    %cst_6 = arith.constant dense<0.000000e+00> : vector<16x4xf32>
    %7 = tpu.matmul %3, %6, %cst_6 {dimension_numbers = #tpu.dot_dimension_numbers<[1], [1], [0], [0], [0, 0, 1, 0], [], []>} : vector<16x128xbf16>, vector<4x128xbf16>, vector<16x4xf32> -> vector<16x4xf32>
    %8 = arith.truncf %7 : vector<16x4xf32> to vector<16x4xbf16>
    %c0_7 = arith.constant 0 : index
    %c0_8 = arith.constant 0 : index
    %9 = vector.load %arg5[%c0_7, %c0_8] : memref<128x4xbf16, #tpu.memory_space<vmem>>, vector<128x4xbf16>
    %cst_9 = arith.constant dense<0.000000e+00> : vector<16x128xf32>
    %10 = tpu.matmul %8, %9, %cst_9 {dimension_numbers = #tpu.dot_dimension_numbers<[1], [1], [0], [0], [0, 0, 1, 0], [], []>} : vector<16x4xbf16>, vector<128x4xbf16>, vector<16x128xf32> -> vector<16x128xf32>
    %c0_10 = arith.constant 0 : index
    %c0_11 = arith.constant 0 : index
    %11 = vector.load %arg9[%c0_10, %c0_11] : memref<16x128xf32, #tpu.memory_space<vmem>>, vector<16x128xf32>
    %12 = arith.addf %5, %10 : vector<16x128xf32>
    %13 = arith.addf %11, %12 : vector<16x128xf32>
    %c0_12 = arith.constant 0 : index
    %c0_13 = arith.constant 0 : index
    %14 = vector.load %arg9[%c0_12, %c0_13] : memref<16x128xf32, #tpu.memory_space<vmem>>, vector<16x128xf32>
    tpu.vector_store %arg9[%c0_12, %c0_13], %13 {strides = array<i32>} : memref<16x128xf32, #tpu.memory_space<vmem>>, vector<16x128xf32>,
    %c0_i32_14 = arith.constant 0 : i32
    %15 = arith.cmpi eq, %arg2, %c0_i32_14 : i32
    %16 = arith.extui %15 : i1 to i32
    %c0_i32_15 = arith.constant 0 : i32
    %17 = arith.cmpi ne, %16, %c0_i32_15 : i32
    scf.if %17 {
      %c0_16 = arith.constant 0 : index
      %c0_17 = arith.constant 0 : index
      %18 = vector.load %arg9[%c0_16, %c0_17] : memref<16x128xf32, #tpu.memory_space<vmem>>, vector<16x128xf32>
      %c0_18 = arith.constant 0 : index
      %c0_19 = arith.constant 0 : index
      %19 = vector.load %arg7[%c0_18, %c0_19] : memref<1x128xf32, #tpu.memory_space<vmem>>, vector<1x128xf32>
      %20 = vector.broadcast %19 : vector<1x128xf32> to vector<16x128xf32>
      %21 = arith.addf %18, %20 : vector<16x128xf32>
      %c0_20 = arith.constant 0 : index
      %c0_21 = arith.constant 0 : index
      %22 = vector.load %arg8[%c0_20, %c0_21] : memref<16x128xf32, #tpu.memory_space<vmem>>, vector<16x128xf32>
      tpu.vector_store %arg8[%c0_20, %c0_21], %21 {strides = array<i32>} : memref<16x128xf32, #tpu.memory_space<vmem>>, vector<16x128xf32>,
    } else {
    }
    return
  }
  func.func @transform_0(%arg0: i32, %arg1: i32, %arg2: i32) -> (i32, i32) {
    %c0_i32 = arith.constant 0 : i32
    return %arg0, %arg2 : i32, i32
  }
  func.func @transform_1(%arg0: i32, %arg1: i32, %arg2: i32) -> (i32, i32) {
    %c0_i32 = arith.constant 0 : i32
    return %arg1, %arg2 : i32, i32
  }
  func.func @transform_2(%arg0: i32, %arg1: i32, %arg2: i32) -> (i32, i32) {
    %c0_i32 = arith.constant 0 : i32
    %c0_i32_0 = arith.constant 0 : i32
    return %arg1, %c0_i32 : i32, i32
  }
  func.func @transform_3(%arg0: i32, %arg1: i32, %arg2: i32) -> (i32, i32) {
    %c0_i32 = arith.constant 0 : i32
    %c0_i32_0 = arith.constant 0 : i32
    return %c0_i32, %arg2 : i32, i32
  }
  func.func @transform_4(%arg0: i32, %arg1: i32, %arg2: i32) -> (i32, i32) {
    %c0_i32 = arith.constant 0 : i32
    %c0_i32_0 = arith.constant 0 : i32
    return %c0_i32, %arg1 : i32, i32
  }
  func.func @transform_5(%arg0: i32, %arg1: i32, %arg2: i32) -> (i32, i32) {
    %c0_i32 = arith.constant 0 : i32
    return %arg0, %arg1 : i32, i32
  }
}

</mosaic_0001>

<llo_original>
// kernel: residual_aligner_forward.1
$region0: #{residual_aligner_forward.1}
  #allocation0 [shape = 'u32[]', space=smem, size = 0x4, offset = 0x4, fixed_abs, tag = 'smem constant byte address 0x4 - core index']
  #allocation1 [shape = 'u32[144,128]{1,0:T(1,128)}', space=vmem, size = 0x12000, scoped, tag = 'internal scratch']
  #allocation2 [shape = 'f32[16,128]{1,0:T(8,128)}', space=vmem, size = 0x2000, scoped, tag = 'scratch operand']
  %s0 = inlined_call_operand.vmem [shape: bf16[16,128], index: 0, kind: input, shape index: {}]
  %s1 = inlined_call_operand.vmem [shape: bf16[128,128], index: 1, kind: input, shape index: {}]
  %s2 = inlined_call_operand.vmem [shape: bf16[128,4], index: 2, kind: input, shape index: {}]
  %s3 = inlined_call_operand.vmem [shape: bf16[4,128], index: 3, kind: input, shape index: {}]
  %s4 = inlined_call_operand.vmem [shape: f32[1,128], index: 4, kind: input, shape index: {}]
  %s5 = inlined_call_operand.vmem [shape: f32[16,128], index: 5, kind: output, shape index: {}]
  %s6 = sld [smem:[#allocation0]]
  $region38: #{residual_aligner_forward.1} parent=0
    _
  %s8 = ssub.s32 1, %s6
  %s9 = scalar_select 0, %s8, %s6
  // Predicated region
  $region2: #{residual_aligner_forward.1} parent=0 // pred_check
    _
  $region3: #{residual_aligner_forward.1} parent=0 // pred_check_branch
    %11 = sbr.rel (0) target = $region5
  $region4: #{residual_aligner_forward.1} parent=0 // pred_region
    _
  $region5: #{residual_aligner_forward.1} parent=0 // pred_fallthru
    _
  // Predicated region
  $region6: #{residual_aligner_forward.1} parent=0 // pred_check
    _
  $region7: #{residual_aligner_forward.1} parent=0 // pred_check_branch
    %13 = sbr.rel (0) target = $region9
  $region8: #{residual_aligner_forward.1} parent=0 // pred_region
    _
  $region9: #{residual_aligner_forward.1} parent=0 // pred_fallthru
    _
  // Predicated region
  $region10: #{residual_aligner_forward.1} parent=0 // pred_check
    _
  $region11: #{residual_aligner_forward.1} parent=0 // pred_check_branch
    %15 = sbr.rel (0) target = $region13
  $region12: #{residual_aligner_forward.1} parent=0 // pred_region
    _
  $region13: #{residual_aligner_forward.1} parent=0 // pred_fallthru
    _
  // Predicated region
  $region14: #{residual_aligner_forward.1} parent=0 // pred_check
    _
  $region15: #{residual_aligner_forward.1} parent=0 // pred_check_branch
    %17 = sbr.rel (0) target = $region17
  $region16: #{residual_aligner_forward.1} parent=0 // pred_region
    _
  $region17: #{residual_aligner_forward.1} parent=0 // pred_fallthru
    _
  // Predicated region
  $region18: #{residual_aligner_forward.1} parent=0 // pred_check
    _
  $region19: #{residual_aligner_forward.1} parent=0 // pred_check_branch
    %19 = sbr.rel (0) target = $region21
  $region20: #{residual_aligner_forward.1} parent=0 // pred_region
    _
  $region21: #{residual_aligner_forward.1} parent=0 // pred_fallthru
    _
  %p21 = scmp.eq.s32.totalorder 0, 0
  // Predicated region
  $region22: #{residual_aligner_forward.1} parent=0 // pred_check
    %p22 = pneg %p21
  $region23: #{residual_aligner_forward.1} parent=0 // pred_check_branch
    %24 = sbr.rel (%p22) target = $region25
  $region24: #{residual_aligner_forward.1} parent=0 // pred_region
    %25 = vst [vmem:[#allocation2] sm:$0xff] 0.0
    %26 = vst [vmem:[#allocation2 + $0x8] sm:$0xff] 0.0
  $region25: #{residual_aligner_forward.1} parent=0 // pred_fallthru
    _
  %v27 = vld [vmem:[%s0] sm:$0xf]
  %v28 = vld [vmem:[%s0 + $0x4] sm:$0xf]
  %v29 = vld [vmem:[%s1] sm:$0xf]
  %v30 = vld [vmem:[%s1 + $0x4] sm:$0xf]
  %v31 = vld [vmem:[%s1 + $0x8] sm:$0xf]
  %v32 = vld [vmem:[%s1 + $0xc] sm:$0xf]
  %v33 = vld [vmem:[%s1 + $0x10] sm:$0xf]
  %v34 = vld [vmem:[%s1 + $0x14] sm:$0xf]
  %v35 = vld [vmem:[%s1 + $0x18] sm:$0xf]
  %v36 = vld [vmem:[%s1 + $0x1c] sm:$0xf]
  %v37 = vld [vmem:[%s1 + $0x20] sm:$0xf]
  %v38 = vld [vmem:[%s1 + $0x24] sm:$0xf]
  %v39 = vld [vmem:[%s1 + $0x28] sm:$0xf]
  %v40 = vld [vmem:[%s1 + $0x2c] sm:$0xf]
  %v41 = vld [vmem:[%s1 + $0x30] sm:$0xf]
  %v42 = vld [vmem:[%s1 + $0x34] sm:$0xf]
  %v43 = vld [vmem:[%s1 + $0x38] sm:$0xf]
  %v44 = vld [vmem:[%s1 + $0x3c] sm:$0xf]
  %v45 = vld [vmem:[%s3] sm:$0x3]
  %v48 = vunpack.c.l.b16 %v27
  %v49 = vunpack.c.l.b16 %v28
  %v50 = vpack.c.b16 %v49, %v48
  %52 = vmatprep.subr.bf16.mxu0 0
  %53 = vmatpush1.bf16.xpose.msra.mxu0 0
  %54 = vmatprep.subr.bf16.mxu0 0
  %55 = vmatpush1.bf16.xpose.msra.mxu0 0
  %56 = vmatprep.subr.bf16.mxu0 0
  %57 = vmatpush1.bf16.xpose.msra.mxu0 0
  %58 = vmatprep.subr.bf16.mxu0 0
  %59 = vmatpush1.bf16.xpose.msra.mxu0 0
  %60 = vmatprep.subr.bf16.mxu0 0
  %61 = vmatpush1.bf16.xpose.msra.mxu0 0
  %62 = vmatprep.subr.bf16.mxu0 0
  %63 = vmatpush1.bf16.xpose.msra.mxu0 0
  %64 = vmatprep.subr.bf16.mxu0 0
  %65 = vmatpush1.bf16.xpose.msra.mxu0 0
  %66 = vmatprep.subr.bf16.mxu0 0
  %67 = vmatpush1.bf16.xpose.msra.mxu0 %v45
  %68 = vmatprep.subr.bf16.mxu0 0
  %69 = vmatpush2.bf16.xpose.msra.mxu0 0
  %70 = vmatprep.subr.bf16.mxu0 0
  %71 = vmatpush2.bf16.xpose.msra.mxu0 0
  %72 = vmatprep.subr.bf16.mxu0 0
  %73 = vmatpush2.bf16.xpose.msra.mxu0 0
  %74 = vmatprep.subr.bf16.mxu0 0
  %75 = vmatpush2.bf16.xpose.msra.mxu0 0
  %76 = vmatprep.subr.bf16.mxu0 0
  %77 = vmatpush2.bf16.xpose.msra.mxu0 0
  %78 = vmatprep.subr.bf16.mxu0 0
  %79 = vmatpush2.bf16.xpose.msra.mxu0 0
  %80 = vmatprep.subr.bf16.mxu0 0
  %81 = vmatpush2.bf16.xpose.msra.mxu0 0
  %82 = vmatprep.subr.bf16.mxu0 0
  %83 = vmatpush2.bf16.xpose.msra.mxu0 0
  %84 = vmatprep.mubr.bf16.mxu0 0
  %85 = vmatmul.mubr.bf16.gmra.mxu0 %v50
  %v86 = vpop.f32.mrf.mxu0
  %v87 = vadd.f32 0.0, %v86
  %v88 = vpop.f32.mrf.mxu0
  %v89 = vpop.f32.mrf.mxu0
  %v90 = vadd.f32 0.0, %v89
  %v91 = vpop.f32.mrf.mxu0
  %92 = vdwg.mxu0
  %v93 = vpack.c.bf16 %v90, %v87
  %v94 = vld [vmem:[%s2] sm:$0xf]
  %v95 = vld [vmem:[%s2 + $0x4] sm:$0xf]
  %v96 = vld [vmem:[%s2 + $0x8] sm:$0xf]
  %v97 = vld [vmem:[%s2 + $0xc] sm:$0xf]
  %v98 = vld [vmem:[%s2 + $0x10] sm:$0xf]
  %v99 = vld [vmem:[%s2 + $0x14] sm:$0xf]
  %v100 = vld [vmem:[%s2 + $0x18] sm:$0xf]
  %v101 = vld [vmem:[%s2 + $0x1c] sm:$0xf]
  %v102 = vld [vmem:[%s2 + $0x20] sm:$0xf]
  %v103 = vld [vmem:[%s2 + $0x24] sm:$0xf]
  %v104 = vld [vmem:[%s2 + $0x28] sm:$0xf]
  %v105 = vld [vmem:[%s2 + $0x2c] sm:$0xf]
  %v106 = vld [vmem:[%s2 + $0x30] sm:$0xf]
  %v107 = vld [vmem:[%s2 + $0x34] sm:$0xf]
  %v108 = vld [vmem:[%s2 + $0x38] sm:$0xf]
  %v109 = vld [vmem:[%s2 + $0x3c] sm:$0xf]
  %v126 = vunpack.c.l.b16 %v94
  %v127 = vunpack.c.l.b16 %v95
  %v128 = vunpack.c.l.b16 %v96
  %v129 = vunpack.c.l.b16 %v97
  %v130 = vunpack.c.l.b16 %v98
  %v131 = vunpack.c.l.b16 %v99
  %v132 = vunpack.c.l.b16 %v100
  %v133 = vunpack.c.l.b16 %v101
  %v134 = vunpack.c.l.b16 %v102
  %v135 = vunpack.c.l.b16 %v103
  %v136 = vunpack.c.l.b16 %v104
  %v137 = vunpack.c.l.b16 %v105
  %v138 = vunpack.c.l.b16 %v106
  %v139 = vunpack.c.l.b16 %v107
  %v140 = vunpack.c.l.b16 %v108
  %v141 = vunpack.c.l.b16 %v109
  %v142 = vpack.c.b16 %v127, %v126
  %v143 = vpack.c.b16 %v129, %v128
  %v144 = vpack.c.b16 %v131, %v130
  %v145 = vpack.c.b16 %v133, %v132
  %v146 = vpack.c.b16 %v135, %v134
  %v147 = vpack.c.b16 %v137, %v136
  %v148 = vpack.c.b16 %v139, %v138
  %v149 = vpack.c.b16 %v141, %v140
  %vm150 = vcmask 31744
  %v152 = vsel %vm150, %v93, 0
  %v155 = vsel %vm150, %v142, 0
  %v158 = vsel %vm150, %v143, 0
  %v161 = vsel %vm150, %v144, 0
  %v164 = vsel %vm150, %v145, 0
  %v167 = vsel %vm150, %v146, 0
  %v170 = vsel %vm150, %v147, 0
  %v173 = vsel %vm150, %v148, 0
  %v176 = vsel %vm150, %v149, 0
  %178 = vmatprep.subr.bf16.mxu0 0
  %179 = vmatpush1.bf16.xpose.msra.mxu0 %v176
  %180 = vmatprep.subr.bf16.mxu0 0
  %181 = vmatpush1.bf16.xpose.msra.mxu0 %v173
  %182 = vmatprep.subr.bf16.mxu0 0
  %183 = vmatpush1.bf16.xpose.msra.mxu0 %v170
  %184 = vmatprep.subr.bf16.mxu0 0
  %185 = vmatpush1.bf16.xpose.msra.mxu0 %v167
  %186 = vmatprep.subr.bf16.mxu0 0
  %187 = vmatpush1.bf16.xpose.msra.mxu0 %v164
  %188 = vmatprep.subr.bf16.mxu0 0
  %189 = vmatpush1.bf16.xpose.msra.mxu0 %v161
  %190 = vmatprep.subr.bf16.mxu0 0
  %191 = vmatpush1.bf16.xpose.msra.mxu0 %v158
  %192 = vmatprep.subr.bf16.mxu0 0
  %193 = vmatpush1.bf16.xpose.msra.mxu0 %v155
  %194 = vmatprep.subr.bf16.mxu0 0
  %195 = vmatpush2.bf16.xpose.msra.mxu0 0
  %196 = vmatprep.subr.bf16.mxu0 0
  %197 = vmatpush2.bf16.xpose.msra.mxu0 0
  %198 = vmatprep.subr.bf16.mxu0 0
  %199 = vmatpush2.bf16.xpose.msra.mxu0 0
  %200 = vmatprep.subr.bf16.mxu0 0
  %201 = vmatpush2.bf16.xpose.msra.mxu0 0
  %202 = vmatprep.subr.bf16.mxu0 0
  %203 = vmatpush2.bf16.xpose.msra.mxu0 0
  %204 = vmatprep.subr.bf16.mxu0 0
  %205 = vmatpush2.bf16.xpose.msra.mxu0 0
  %206 = vmatprep.subr.bf16.mxu0 0
  %207 = vmatpush2.bf16.xpose.msra.mxu0 0
  %208 = vmatprep.subr.bf16.mxu0 0
  %209 = vmatpush2.bf16.xpose.msra.mxu0 0
  %210 = vmatprep.mubr.bf16.mxu0 0
  %211 = vmatmul.mubr.bf16.gmra.mxu0 %v152
  %v212 = vpop.f32.mrf.mxu0
  %v213 = vadd.f32 0.0, %v212
  %v214 = vpop.f32.mrf.mxu0
  %v215 = vpop.f32.mrf.mxu0
  %v216 = vadd.f32 0.0, %v215
  %v217 = vpop.f32.mrf.mxu0
  %218 = vdwg.mxu0
  %v219 = vld [vmem:[#allocation2] sm:$0xff]
  %v220 = vld [vmem:[#allocation2 + $0x8] sm:$0xff]
  %v237 = vunpack.c.l.b16 %v29
  %v238 = vunpack.c.l.b16 %v30
  %v239 = vunpack.c.l.b16 %v31
  %v240 = vunpack.c.l.b16 %v32
  %v241 = vunpack.c.l.b16 %v33
  %v242 = vunpack.c.l.b16 %v34
  %v243 = vunpack.c.l.b16 %v35
  %v244 = vunpack.c.l.b16 %v36
  %v245 = vunpack.c.l.b16 %v37
  %v246 = vunpack.c.l.b16 %v38
  %v247 = vunpack.c.l.b16 %v39
  %v248 = vunpack.c.l.b16 %v40
  %v249 = vunpack.c.l.b16 %v41
  %v250 = vunpack.c.l.b16 %v42
  %v251 = vunpack.c.l.b16 %v43
  %v252 = vunpack.c.l.b16 %v44
  %v253 = vpack.c.b16 %v238, %v237
  %v254 = vpack.c.b16 %v240, %v239
  %v255 = vpack.c.b16 %v242, %v241
  %v256 = vpack.c.b16 %v244, %v243
  %v257 = vpack.c.b16 %v246, %v245
  %v258 = vpack.c.b16 %v248, %v247
  %v259 = vpack.c.b16 %v250, %v249
  %v260 = vpack.c.b16 %v252, %v251
  %269 = vmatprep.subr.bf16.mxu0 0
  %270 = vmatpush1.bf16.xpose.msra.mxu0 %v260
  %271 = vmatprep.subr.bf16.mxu0 0
  %272 = vmatpush1.bf16.xpose.msra.mxu0 %v259
  %273 = vmatprep.subr.bf16.mxu0 0
  %274 = vmatpush1.bf16.xpose.msra.mxu0 %v258
  %275 = vmatprep.subr.bf16.mxu0 0
  %276 = vmatpush1.bf16.xpose.msra.mxu0 %v257
  %277 = vmatprep.subr.bf16.mxu0 0
  %278 = vmatpush1.bf16.xpose.msra.mxu0 %v256
  %279 = vmatprep.subr.bf16.mxu0 0
  %280 = vmatpush1.bf16.xpose.msra.mxu0 %v255
  %281 = vmatprep.subr.bf16.mxu0 0
  %282 = vmatpush1.bf16.xpose.msra.mxu0 %v254
  %283 = vmatprep.subr.bf16.mxu0 0
  %284 = vmatpush1.bf16.xpose.msra.mxu0 %v253
  %285 = vmatprep.subr.bf16.mxu0 0
  %286 = vmatpush2.bf16.xpose.msra.mxu0 0
  %287 = vmatprep.subr.bf16.mxu0 0
  %288 = vmatpush2.bf16.xpose.msra.mxu0 0
  %289 = vmatprep.subr.bf16.mxu0 0
  %290 = vmatpush2.bf16.xpose.msra.mxu0 0
  %291 = vmatprep.subr.bf16.mxu0 0
  %292 = vmatpush2.bf16.xpose.msra.mxu0 0
  %293 = vmatprep.subr.bf16.mxu0 0
  %294 = vmatpush2.bf16.xpose.msra.mxu0 0
  %295 = vmatprep.subr.bf16.mxu0 0
  %296 = vmatpush2.bf16.xpose.msra.mxu0 0
  %297 = vmatprep.subr.bf16.mxu0 0
  %298 = vmatpush2.bf16.xpose.msra.mxu0 0
  %299 = vmatprep.subr.bf16.mxu0 0
  %300 = vmatpush2.bf16.xpose.msra.mxu0 0
  %301 = vmatprep.mubr.bf16.mxu0 0
  %302 = vmatmul.mubr.bf16.gmra.mxu0 %v50
  %v303 = vpop.f32.mrf.mxu0
  %v304 = vadd.f32 %v213, %v303
  %v305 = vpop.f32.mrf.mxu0
  %v306 = vpop.f32.mrf.mxu0
  %v307 = vadd.f32 %v216, %v306
  %v308 = vpop.f32.mrf.mxu0
  %309 = vdwg.mxu0
  %v310 = vadd.f32 %v219, %v304
  %v311 = vadd.f32 %v220, %v307
  %312 = vst [vmem:[#allocation2] sm:$0xff] %v310
  %313 = vst [vmem:[#allocation2 + $0x8] sm:$0xff] %v311
  // Predicated region
  $region26: #{residual_aligner_forward.1} parent=0 // pred_check
    %p314 = pneg %p21
  $region27: #{residual_aligner_forward.1} parent=0 // pred_check_branch
    %316 = sbr.rel (%p314) target = $region29
  $region28: #{residual_aligner_forward.1} parent=0 // pred_region
    %v317 = vld [vmem:[#allocation2] sm:$0xff]
    %v318 = vld [vmem:[#allocation2 + $0x8] sm:$0xff]
    %v319 = vld [vmem:[%s4] sm:$0x1]
    %v321 = vlaneseq
    %v322 = vshrl.u32 %v321, 7
    %v323 = vsub.s32 0, %v322
    %v324 = vrot.slane %v319, %v323
    %v326 = vadd.f32 %v317, %v324
    %v327 = vadd.f32 %v318, %v324
    %328 = vst [vmem:[%s5] sm:$0xff] %v326
    %329 = vst [vmem:[%s5 + $0x8] sm:$0xff] %v327
  $region29: #{residual_aligner_forward.1} parent=0 // pred_fallthru
    _
  // Predicated region
  $region30: #{residual_aligner_forward.1} parent=0 // pred_check
    _
  $region31: #{residual_aligner_forward.1} parent=0 // pred_check_branch
    %331 = sbr.rel (0) target = $region33
  $region32: #{residual_aligner_forward.1} parent=0 // pred_region
    _
  $region33: #{residual_aligner_forward.1} parent=0 // pred_fallthru
    _
  // Predicated region
  $region34: #{residual_aligner_forward.1} parent=0 // pred_check
    _
  $region35: #{residual_aligner_forward.1} parent=0 // pred_check_branch
    %333 = sbr.rel (0) target = $region37
  $region36: #{residual_aligner_forward.1} parent=0 // pred_region
    _
  $region37: #{residual_aligner_forward.1} parent=0 // pred_fallthru
    _

</llo_original>
